<compile_context>
chip_gen: v7x
topology: tpu7x:2x2x1
jax: 0.10.0
libtpu: 0.0.40
codegen_flags: <defaults>
</compile_context>

<pallas_src>
import functools
import math

import jax
import jax.numpy as jnp
from jax.experimental import pallas as pl
from jax.experimental.pallas import tpu as pltpu


_LANE = 128          # F padded up to a multiple of 128 (lane-dense stores)
_SUBLANE_BF16 = 16   # bf16 packs 16 sublanes per vreg -> pad batch to 16
_MAX_BTILE = 256     # fills the 256x256 MXU on v6e/v7x (2 passes of 128 on v5e)


def _round_up(x: int, m: int) -> int:
    return (x + m - 1) // m * m


def _choose_tk(dims, fp: int) -> int:
    """Largest TK whose per-modality K padding stays small (cuts wasted bytes
    in the dominant HBM weight stream) while a double-buffered [TK, Fp] bf16
    weight tile stays comfortably inside VMEM on every generation."""
    true_total = sum(_round_up(d, _LANE) for d in dims)
    w_tile_budget = 4 * 1024 * 1024                       # x2 for double buffer
    for tk in (2048, 1024, 512, 256, 128):
        if 2 * tk * fp * 2 > w_tile_budget:
            continue
        padded = sum(_round_up(d, tk) for d in dims)
        if padded * 8 <= true_total * 9:                  # <= 12.5% K inflation
            return tk
    return _LANE


# --------------------------------------------------------------------------
# Fused Pallas kernel: K-tiled projections + online softmax over modalities
# --------------------------------------------------------------------------
def _make_fused_kernel(inv_f: float):
    """inv_f = 1 / true fusion_dim (padded F columns of W and b are exactly 0)."""

    def kernel(kblk_ref, mid_ref, first_ref, last_ref,   # scalar prefetch (SMEM)
               x_ref, w_ref, b_ref,                      # VMEM input blocks
               o_ref,                                    # VMEM output (resident per B-tile)
               acc_ref, m_ref, l_ref):                   # VMEM scratch
        del kblk_ref, mid_ref                            # consumed by the index_maps
        k = pl.program_id(1)

        # ---- new batch tile: reset online-softmax state and resident output --
        @pl.when(k == 0)
        def _():
            o_ref[...] = jnp.zeros_like(o_ref)
            l_ref[...] = jnp.zeros_like(l_ref)
            m_ref[...] = jnp.full_like(m_ref, -jnp.inf)

        # ---- first K-chunk of a modality: plain zero-init of the accumulator -
        @pl.when(first_ref[k] == 1)
        def _():
            acc_ref[...] = jnp.zeros_like(acc_ref)

        # ---- one K-chunk of the projection (bf16 x bf16 -> f32 on the MXU) ---
        acc_ref[...] += jnp.dot(x_ref[...], w_ref[...],
                                preferred_element_type=jnp.float32)

        # ---- modality finished: bias epilogue + streaming softmax update -----
        @pl.when(last_ref[k] == 1)
        def _():
            e = acc_ref[...] + b_ref[0]                       # [bt,Fp] + [1,Fp]
            # Padded F columns are exactly zero -> mean over the true F only.
            s = jnp.sum(e, axis=-1, keepdims=True) * inv_f    # [bt, 1]
            m_new = jnp.maximum(m_ref[...], s)
            alpha = jnp.exp(m_ref[...] - m_new)
            p = jnp.exp(s - m_new)
            l_ref[...] = alpha * l_ref[...] + p
            o_ref[...] = alpha * o_ref[...] + p * e           # accumulate in place
            m_ref[...] = m_new

        # ---- all modalities done for this batch tile: exact normalization ----
        @pl.when(k == pl.num_programs(1) - 1)
        def _():
            o_ref[...] = o_ref[...] / l_ref[...]

    return kernel


# --------------------------------------------------------------------------
# Jitted wrapper: activation packing + pallas_call (single fused XLA program)
# --------------------------------------------------------------------------
@functools.partial(jax.jit, static_argnames=("fusion_dim", "tk", "bp", "bt", "fp"))
def _omnifusion_forward(modalities, w_cat, b_cat, kblk, mid, first, last,
                        *, fusion_dim, tk, bp, bt, fp):
    batch = modalities[0].shape[0]

    # Flatten / cast / pad / concat inside jit -> one fused producer of x_cat.
    x_blocks = []
    for m in modalities:
        flat = m.reshape(batch, -1).astype(jnp.bfloat16)
        d = flat.shape[1]
        dp = _round_up(d, tk)
        x_blocks.append(jnp.pad(flat, ((0, bp - batch), (0, dp - d))))
    x_cat = jnp.concatenate(x_blocks, axis=1)                 # [Bp, sum Dp] bf16

    d_tot = x_cat.shape[1]
    g_steps = kblk.shape[0]
    nbt = bp // bt

    kernel = _make_fused_kernel(1.0 / float(fusion_dim))

    cost = pl.CostEstimate(
        flops=2 * bp * d_tot * fp,
        transcendentals=2 * g_steps * bt,
        bytes_accessed=(x_cat.size * 2 + nbt * w_cat.size * 2
                        + b_cat.size * 4 + bp * fp * 4),
    )

    out = pl.pallas_call(
        kernel,
        out_shape=jax.ShapeDtypeStruct((bp, fp), jnp.float32),
        grid_spec=pltpu.PrefetchScalarGridSpec(
            num_scalar_prefetch=4,
            grid=(nbt, g_steps),
            in_specs=[
                # X chunk: [bt, tk] at (batch tile bi, concatenated K-block kblk[k])
                pl.BlockSpec((bt, tk), lambda bi, k, kb, md, fs, ls: (bi, kb[k])),
                # W chunk: [tk, Fp] at the same K-block
                pl.BlockSpec((tk, fp), lambda bi, k, kb, md, fs, ls: (kb[k], 0)),
                # Bias row of the current modality: [1, 1, Fp]
                pl.BlockSpec((1, 1, fp), lambda bi, k, kb, md, fs, ls: (md[k], 0, 0)),
            ],
            out_specs=pl.BlockSpec((bt, fp), lambda bi, k, kb, md, fs, ls: (bi, 0)),
            scratch_shapes=[
                pltpu.VMEM((bt, fp), jnp.float32),   # current-modality projection acc
                pltpu.VMEM((bt, 1), jnp.float32),    # running max of scores
                pltpu.VMEM((bt, 1), jnp.float32),    # running softmax denominator
            ],
        ),
        compiler_params=pltpu.CompilerParams(
            # Batch tiles are independent (v7x: one per TensorCore); the K axis
            # carries the reduction / online-softmax state.
            dimension_semantics=("parallel", "arbitrary"),
            vmem_limit_bytes=32 * 1024 * 1024,
        ),
        cost_estimate=cost,
    )(kblk, mid, first, last, x_cat, w_cat, b_cat)

    return out[:batch, :fusion_dim]


# --------------------------------------------------------------------------
# Module (lazy per-modality Linear, mirroring the PyTorch nn.ModuleList growth)
# --------------------------------------------------------------------------
class OmniModalFusion:
    def __init__(self, fusion_dim: int, key=None):
        self.fusion_dim = fusion_dim
        self._key = key if key is not None else jax.random.PRNGKey(0)
        self._params = []        # list of (W [D_i, F] f32, b [F] f32)
        self._packed_cache = {}  # dims tuple -> packed weights + schedule

    def _ensure_encoder(self, idx: int, input_dim: int):
        while len(self._params) <= idx:
            self._key, kw, kb = jax.random.split(self._key, 3)
            bound = 1.0 / (input_dim ** 0.5)       # nn.Linear default init range
            w = jax.random.uniform(kw, (input_dim, self.fusion_dim),
                                   jnp.float32, -bound, bound)
            b = jax.random.uniform(kb, (self.fusion_dim,),
                                   jnp.float32, -bound, bound)
            self._params.append((w, b))

    def _pack_params(self, dims):
        key = tuple(dims)
        if key in self._packed_cache:
            return self._packed_cache[key]
        f = self.fusion_dim
        fp = _round_up(f, _LANE)
        tk = _choose_tk(dims, fp)

        w_blocks, b_rows = [], []
        kblk, mid, first, last = [], [], [], []
        blk = 0
        for i, d in enumerate(dims):
            w, b = self._params[i]
            dp = _round_up(d, tk)
            # zero-pad K rows and F columns; padded columns stay exactly zero
            w_blocks.append(
                jnp.pad(w, ((0, dp - d), (0, fp - f))).astype(jnp.bfloat16))
            b_rows.append(jnp.pad(b, (0, fp - f))[None, None, :])
            nk = dp // tk
            for k in range(nk):
                kblk.append(blk + k)
                mid.append(i)
                first.append(1 if k == 0 else 0)
                last.append(1 if k == nk - 1 else 0)
            blk += nk
        w_cat = jnp.concatenate(w_blocks, axis=0)          # [sum Dp, Fp] bf16
        b_cat = jnp.concatenate(b_rows, axis=0)            # [M, 1, Fp]    f32
        sched = tuple(jnp.asarray(a, jnp.int32) for a in (kblk, mid, first, last))
        packed = (w_cat, b_cat, sched, fp, tk)
        self._packed_cache[key] = packed
        return packed

    def __call__(self, *modalities):
        batch = modalities[0].shape[0]
        dims = []
        for i, m in enumerate(modalities):
            d = math.prod(m.shape[1:]) if len(m.shape) > 1 else 1
            dims.append(d)
            self._ensure_encoder(i, d)

        w_cat, b_cat, (kblk, mid, first, last), fp, tk = self._pack_params(tuple(dims))

        # Batch tiling: bf16 packs 16 sublanes; large batches use 256-row tiles.
        bp = _round_up(batch, _SUBLANE_BF16)
        bt = min(bp, _MAX_BTILE)
        bp = _round_up(bp, bt)

        return _omnifusion_forward(tuple(modalities), w_cat, b_cat,
                                   kblk, mid, first, last,
                                   fusion_dim=self.fusion_dim, tk=tk,
                                   bp=bp, bt=bt, fp=fp)


# --------------------------------------------------------------------------
# Pure-JAX (float32) reference
# --------------------------------------------------------------------------
def _reference(modalities, params):
    embs = []
    for (w, b), m in zip(params, modalities):
        x = m.reshape(m.shape[0], -1).astype(jnp.float32)
        embs.append(x @ w + b[None, :])
    stacked = jnp.stack(embs, axis=1)                       # [B, M, F]
    scores = jnp.mean(stacked, axis=-1)                     # [B, M]
    weights = jax.nn.softmax(scores, axis=1)[..., None]     # [B, M, 1]
    return jnp.sum(weights * stacked, axis=1)               # [B, F]


if __name__ == "__main__":
    key = jax.random.PRNGKey(0)
    k1, k2, k3, kparam = jax.random.split(key, 4)

    B = 2
    fusion_dim = 32

    # Three modalities with different shapes:
    #   image-like : [B, 4, 16, 16] -> D = 1024
    #   sequence   : [B, 8, 32]     -> D = 256
    #   vector     : [B, 64]        -> D = 64
    img = jax.random.normal(k1, (B, 4, 16, 16), jnp.float32)
    seq = jax.random.normal(k2, (B, 8, 32), jnp.float32)
    vec = jax.random.normal(k3, (B, 64), jnp.float32)

    model = OmniModalFusion(fusion_dim, key=kparam)
    fused = jax.block_until_ready(model(img, seq, vec))

    assert fused.shape == (B, fusion_dim)
    assert bool(jnp.all(jnp.isfinite(fused)))

    ref = _reference([img, seq, vec], model._params)
    # Kernel streams X/W in bf16 (MXU-native); normalization is exact f32, so
    # only the bf16 streaming error remains vs. the f32 reference.
    max_err = float(jnp.max(jnp.abs(fused - ref)))
    assert jnp.allclose(fused, ref, atol=3e-2, rtol=3e-2), f"mismatch: {max_err}"

    print("KERNEL_OK")
</pallas_src>

<mosaic_0001>
module attributes {stable_mosaic.version = 11 : i64} {
  func.func @kernel(%arg0: i32, %arg1: i32, %arg2: memref<6xi32, #tpu.memory_space<smem>>, %arg3: memref<6xi32, #tpu.memory_space<smem>>, %arg4: memref<6xi32, #tpu.memory_space<smem>>, %arg5: memref<6xi32, #tpu.memory_space<smem>>, %arg6: memref<16x256xbf16, #tpu.memory_space<vmem>>, %arg7: memref<256x128xbf16, #tpu.memory_space<vmem>>, %arg8: memref<1x1x128xf32, #tpu.memory_space<vmem>>, %arg9: memref<16x128xf32, #tpu.memory_space<vmem>>, %arg10: memref<16x128xf32, #tpu.memory_space<vmem>>, %arg11: memref<16x1xf32, #tpu.memory_space<vmem>>, %arg12: memref<16x1xf32, #tpu.memory_space<vmem>>) attributes {dimension_semantics = [#tpu.dimension_semantics<parallel>, #tpu.dimension_semantics<arbitrary>], iteration_bounds = array<i64: 1, 6>, scalar_prefetch = 4 : i64, scratch_operands = 3 : i64, tpu.core_type = #tpu.core_type<tc>, window_params = [{transform_indices = @transform_0, window_bounds = array<i64: 16, 256>}, {transform_indices = @transform_1, window_bounds = array<i64: 256, 128>}, {transform_indices = @transform_2, window_bounds = array<i64: 1, 1, 128>}, {transform_indices = @transform_3, window_bounds = array<i64: 16, 128>}]} {
    %c0_i32 = arith.constant 0 : i32
    %0 = arith.cmpi eq, %arg1, %c0_i32 : i32
    %1 = arith.extui %0 : i1 to i32
    %c0_i32_0 = arith.constant 0 : i32
    %2 = arith.cmpi ne, %1, %c0_i32_0 : i32
    scf.if %2 {
      %cst_12 = arith.constant 0.000000e+00 : f32
      %22 = vector.broadcast %cst_12 : f32 to vector<16x128xf32>
      %c0_13 = arith.constant 0 : index
      %c0_14 = arith.constant 0 : index
      %23 = vector.load %arg9[%c0_13, %c0_14] : memref<16x128xf32, #tpu.memory_space<vmem>>, vector<16x128xf32>
      tpu.vector_store %arg9[%c0_13, %c0_14], %22 {strides = array<i32>} : memref<16x128xf32, #tpu.memory_space<vmem>>, vector<16x128xf32>,
      %cst_15 = arith.constant 0.000000e+00 : f32
      %24 = vector.broadcast %cst_15 : f32 to vector<16x1xf32>
      %c0_16 = arith.constant 0 : index
      %c0_17 = arith.constant 0 : index
      %25 = vector.load %arg12[%c0_16, %c0_17] : memref<16x1xf32, #tpu.memory_space<vmem>>, vector<16x1xf32>
      tpu.vector_store %arg12[%c0_16, %c0_17], %24 {strides = array<i32>} : memref<16x1xf32, #tpu.memory_space<vmem>>, vector<16x1xf32>,
      %cst_18 = arith.constant 0xFF800000 : f32
      %26 = vector.broadcast %cst_18 : f32 to vector<16x1xf32>
      %c0_19 = arith.constant 0 : index
      %c0_20 = arith.constant 0 : index
      %27 = vector.load %arg11[%c0_19, %c0_20] : memref<16x1xf32, #tpu.memory_space<vmem>>, vector<16x1xf32>
      tpu.vector_store %arg11[%c0_19, %c0_20], %26 {strides = array<i32>} : memref<16x1xf32, #tpu.memory_space<vmem>>, vector<16x1xf32>,
    } else {
    }
    %3 = arith.index_cast %arg1 : i32 to index
    %4 = memref.load %arg4[%3] : memref<6xi32, #tpu.memory_space<smem>>
    %c1_i32 = arith.constant 1 : i32
    %5 = arith.cmpi eq, %4, %c1_i32 : i32
    %6 = arith.extui %5 : i1 to i32
    %c0_i32_1 = arith.constant 0 : i32
    %7 = arith.cmpi ne, %6, %c0_i32_1 : i32
    scf.if %7 {
      %cst_12 = arith.constant 0.000000e+00 : f32
      %22 = vector.broadcast %cst_12 : f32 to vector<16x128xf32>
      %c0_13 = arith.constant 0 : index
      %c0_14 = arith.constant 0 : index
      %23 = vector.load %arg10[%c0_13, %c0_14] : memref<16x128xf32, #tpu.memory_space<vmem>>, vector<16x128xf32>
      tpu.vector_store %arg10[%c0_13, %c0_14], %22 {strides = array<i32>} : memref<16x128xf32, #tpu.memory_space<vmem>>, vector<16x128xf32>,
    } else {
    }
    %c0 = arith.constant 0 : index
    %c0_2 = arith.constant 0 : index
    %8 = vector.load %arg10[%c0, %c0_2] : memref<16x128xf32, #tpu.memory_space<vmem>>, vector<16x128xf32>
    %c0_3 = arith.constant 0 : index
    %c0_4 = arith.constant 0 : index
    %9 = vector.load %arg6[%c0_3, %c0_4] : memref<16x256xbf16, #tpu.memory_space<vmem>>, vector<16x256xbf16>
    %c0_5 = arith.constant 0 : index
    %c0_6 = arith.constant 0 : index
    %10 = vector.load %arg7[%c0_5, %c0_6] : memref<256x128xbf16, #tpu.memory_space<vmem>>, vector<256x128xbf16>
    %cst = arith.constant dense<0.000000e+00> : vector<16x128xf32>
    %11 = tpu.matmul %9, %10, %cst {dimension_numbers = #tpu.dot_dimension_numbers<[1], [0], [0], [1], [0, 0, 1, 1], [], []>} : vector<16x256xbf16>, vector<256x128xbf16>, vector<16x128xf32> -> vector<16x128xf32>
    %12 = arith.addf %8, %11 : vector<16x128xf32>
    %c0_7 = arith.constant 0 : index
    %c0_8 = arith.constant 0 : index
    %13 = vector.load %arg10[%c0_7, %c0_8] : memref<16x128xf32, #tpu.memory_space<vmem>>, vector<16x128xf32>
    tpu.vector_store %arg10[%c0_7, %c0_8], %12 {strides = array<i32>} : memref<16x128xf32, #tpu.memory_space<vmem>>, vector<16x128xf32>,
    %14 = arith.index_cast %arg1 : i32 to index
    %15 = memref.load %arg5[%14] : memref<6xi32, #tpu.memory_space<smem>>
    %c1_i32_9 = arith.constant 1 : i32
    %16 = arith.cmpi eq, %15, %c1_i32_9 : i32
    %17 = arith.extui %16 : i1 to i32
    %c0_i32_10 = arith.constant 0 : i32
    %18 = arith.cmpi ne, %17, %c0_i32_10 : i32
    scf.if %18 {
      %c0_12 = arith.constant 0 : index
      %c0_13 = arith.constant 0 : index
      %22 = vector.load %arg10[%c0_12, %c0_13] : memref<16x128xf32, #tpu.memory_space<vmem>>, vector<16x128xf32>
      %c0_14 = arith.constant 0 : index
      %c0_15 = arith.constant 0 : index
      %c0_16 = arith.constant 0 : index
      %23 = vector.load %arg8[%c0_14, %c0_15, %c0_16] : memref<1x1x128xf32, #tpu.memory_space<vmem>>, vector<1x1x128xf32>
      %24 = vector.shape_cast %23 : vector<1x1x128xf32> to vector<1x128xf32>
      %25 = vector.broadcast %24 : vector<1x128xf32> to vector<16x128xf32>
      %26 = arith.addf %22, %25 : vector<16x128xf32>
      %cst_17 = arith.constant dense<0.000000e+00> : vector<16xf32>
      %27 = vector.multi_reduction <add>, %26, %cst_17 [1] : vector<16x128xf32> to vector<16xf32>
      %28 = vector.shape_cast %27 : vector<16xf32> to vector<16x1xf32>
      %cst_18 = arith.constant 3.125000e-02 : f32
      %29 = vector.broadcast %cst_18 : f32 to vector<16x1xf32>
      %30 = arith.mulf %28, %29 : vector<16x1xf32>
      %c0_19 = arith.constant 0 : index
      %c0_20 = arith.constant 0 : index
      %31 = vector.load %arg11[%c0_19, %c0_20] : memref<16x1xf32, #tpu.memory_space<vmem>>, vector<16x1xf32>
      %32 = arith.maximumf %31, %30 : vector<16x1xf32>
      %c0_21 = arith.constant 0 : index
      %c0_22 = arith.constant 0 : index
      %33 = vector.load %arg11[%c0_21, %c0_22] : memref<16x1xf32, #tpu.memory_space<vmem>>, vector<16x1xf32>
      %34 = arith.subf %33, %32 : vector<16x1xf32>
      %35 = math.exp %34 : vector<16x1xf32>
      %36 = arith.subf %30, %32 : vector<16x1xf32>
      %37 = math.exp %36 : vector<16x1xf32>
      %c0_23 = arith.constant 0 : index
      %c0_24 = arith.constant 0 : index
      %38 = vector.load %arg12[%c0_23, %c0_24] : memref<16x1xf32, #tpu.memory_space<vmem>>, vector<16x1xf32>
      %39 = arith.mulf %35, %38 : vector<16x1xf32>
      %40 = arith.addf %39, %37 : vector<16x1xf32>
      %c0_25 = arith.constant 0 : index
      %c0_26 = arith.constant 0 : index
      %41 = vector.load %arg12[%c0_25, %c0_26] : memref<16x1xf32, #tpu.memory_space<vmem>>, vector<16x1xf32>
      tpu.vector_store %arg12[%c0_25, %c0_26], %40 {strides = array<i32>} : memref<16x1xf32, #tpu.memory_space<vmem>>, vector<16x1xf32>,
      %c0_27 = arith.constant 0 : index
      %c0_28 = arith.constant 0 : index
      %42 = vector.load %arg9[%c0_27, %c0_28] : memref<16x128xf32, #tpu.memory_space<vmem>>, vector<16x128xf32>
      %43 = vector.broadcast %35 : vector<16x1xf32> to vector<16x128xf32>
      %44 = arith.mulf %43, %42 : vector<16x128xf32>
      %45 = vector.broadcast %37 : vector<16x1xf32> to vector<16x128xf32>
      %46 = arith.mulf %45, %26 : vector<16x128xf32>
      %47 = arith.addf %44, %46 : vector<16x128xf32>
      %c0_29 = arith.constant 0 : index
      %c0_30 = arith.constant 0 : index
      %48 = vector.load %arg9[%c0_29, %c0_30] : memref<16x128xf32, #tpu.memory_space<vmem>>, vector<16x128xf32>
      tpu.vector_store %arg9[%c0_29, %c0_30], %47 {strides = array<i32>} : memref<16x128xf32, #tpu.memory_space<vmem>>, vector<16x128xf32>,
      %c0_31 = arith.constant 0 : index
      %c0_32 = arith.constant 0 : index
      %49 = vector.load %arg11[%c0_31, %c0_32] : memref<16x1xf32, #tpu.memory_space<vmem>>, vector<16x1xf32>
      tpu.vector_store %arg11[%c0_31, %c0_32], %32 {strides = array<i32>} : memref<16x1xf32, #tpu.memory_space<vmem>>, vector<16x1xf32>,
    } else {
    }
    %c5_i32 = arith.constant 5 : i32
    %19 = arith.cmpi eq, %arg1, %c5_i32 : i32
    %20 = arith.extui %19 : i1 to i32
    %c0_i32_11 = arith.constant 0 : i32
    %21 = arith.cmpi ne, %20, %c0_i32_11 : i32
    scf.if %21 {
      %c0_12 = arith.constant 0 : index
      %c0_13 = arith.constant 0 : index
      %22 = vector.load %arg9[%c0_12, %c0_13] : memref<16x128xf32, #tpu.memory_space<vmem>>, vector<16x128xf32>
      %c0_14 = arith.constant 0 : index
      %c0_15 = arith.constant 0 : index
      %23 = vector.load %arg12[%c0_14, %c0_15] : memref<16x1xf32, #tpu.memory_space<vmem>>, vector<16x1xf32>
      %24 = vector.broadcast %23 : vector<16x1xf32> to vector<16x128xf32>
      %25 = arith.divf %22, %24 : vector<16x128xf32>
      %c0_16 = arith.constant 0 : index
      %c0_17 = arith.constant 0 : index
      %26 = vector.load %arg9[%c0_16, %c0_17] : memref<16x128xf32, #tpu.memory_space<vmem>>, vector<16x128xf32>
      tpu.vector_store %arg9[%c0_16, %c0_17], %25 {strides = array<i32>} : memref<16x128xf32, #tpu.memory_space<vmem>>, vector<16x128xf32>,
    } else {
    }
    return
  }
  func.func @transform_0(%arg0: i32, %arg1: i32, %arg2: memref<6xi32, #tpu.memory_space<smem>>, %arg3: memref<6xi32, #tpu.memory_space<smem>>, %arg4: memref<6xi32, #tpu.memory_space<smem>>, %arg5: memref<6xi32, #tpu.memory_space<smem>>) -> (i32, i32) {
    %0 = arith.index_cast %arg1 : i32 to index
    %1 = memref.load %arg2[%0] : memref<6xi32, #tpu.memory_space<smem>>
    %c0_i32 = arith.constant 0 : i32
    return %arg0, %1 : i32, i32
  }
  func.func @transform_1(%arg0: i32, %arg1: i32, %arg2: memref<6xi32, #tpu.memory_space<smem>>, %arg3: memref<6xi32, #tpu.memory_space<smem>>, %arg4: memref<6xi32, #tpu.memory_space<smem>>, %arg5: memref<6xi32, #tpu.memory_space<smem>>) -> (i32, i32) {
    %0 = arith.index_cast %arg1 : i32 to index
    %1 = memref.load %arg2[%0] : memref<6xi32, #tpu.memory_space<smem>>
    %c0_i32 = arith.constant 0 : i32
    %c0_i32_0 = arith.constant 0 : i32
    return %1, %c0_i32 : i32, i32
  }
  func.func @transform_2(%arg0: i32, %arg1: i32, %arg2: memref<6xi32, #tpu.memory_space<smem>>, %arg3: memref<6xi32, #tpu.memory_space<smem>>, %arg4: memref<6xi32, #tpu.memory_space<smem>>, %arg5: memref<6xi32, #tpu.memory_space<smem>>) -> (i32, i32, i32) {
    %0 = arith.index_cast %arg1 : i32 to index
    %1 = memref.load %arg3[%0] : memref<6xi32, #tpu.memory_space<smem>>
    %c0_i32 = arith.constant 0 : i32
    %c0_i32_0 = arith.constant 0 : i32
    %c0_i32_1 = arith.constant 0 : i32
    return %1, %c0_i32, %c0_i32_0 : i32, i32, i32
  }
  func.func @transform_3(%arg0: i32, %arg1: i32, %arg2: memref<6xi32, #tpu.memory_space<smem>>, %arg3: memref<6xi32, #tpu.memory_space<smem>>, %arg4: memref<6xi32, #tpu.memory_space<smem>>, %arg5: memref<6xi32, #tpu.memory_space<smem>>) -> (i32, i32) {
    %c0_i32 = arith.constant 0 : i32
    %c0_i32_0 = arith.constant 0 : i32
    return %arg0, %c0_i32 : i32, i32
  }
}

</mosaic_0001>

<llo_original>
// kernel: _omnifusion_forward.1
$region0: #{_omnifusion_forward.1}
  #allocation0 [shape = 'u32[]', space=smem, size = 0x4, offset = 0x4, fixed_abs, tag = 'smem constant byte address 0x4 - core index']
  #allocation1 [shape = 'u32[144,128]{1,0:T(1,128)}', space=vmem, size = 0x12000, scoped, tag = 'internal scratch']
  #allocation2 [shape = 'f32[16,128]{1,0:T(8,128)}', space=vmem, size = 0x2000, scoped, tag = 'scratch operand']
  #allocation3 [shape = 'f32[16,1]{1,0:T(8,128)}', space=vmem, size = 0x2000, scoped, tag = 'scratch operand']
  #allocation4 [shape = 'f32[16,1]{1,0:T(8,128)}', space=vmem, size = 0x2000, scoped, tag = 'scratch operand']
  #allocation5 [shape = 's32[1]{0}', space=sflag, size = 0x4, scoped, tag = 'scoped memory for _omnifusion_forward.1']
  #allocation6 [shape = 'u8[512]{0}', space=smem, size = 0x200, scoped, tag = 'prefetched SMEM operand 0']
  #allocation7 [shape = 'u8[512]{0}', space=smem, size = 0x200, scoped, tag = 'prefetched SMEM operand 1']
  #allocation8 [shape = 'u8[512]{0}', space=smem, size = 0x200, scoped, tag = 'prefetched SMEM operand 2']
  #allocation9 [shape = 'u8[512]{0}', space=smem, size = 0x200, scoped, tag = 'prefetched SMEM operand 3']
  %s0 = inlined_call_operand.vmem [shape: s32[6], index: 0, kind: input, shape index: {}]
  %s1 = inlined_call_operand.vmem [shape: s32[6], index: 1, kind: input, shape index: {}]
  %s2 = inlined_call_operand.vmem [shape: s32[6], index: 2, kind: input, shape index: {}]
  %s3 = inlined_call_operand.vmem [shape: s32[6], index: 3, kind: input, shape index: {}]
  %s4 = inlined_call_operand.vmem [shape: bf16[16,1536], index: 4, kind: input, shape index: {}]
  %s5 = inlined_call_operand.hbm [shape: bf16[1536,128], index: 5, kind: input, shape index: {}]
  %s6 = inlined_call_operand.vmem [shape: f32[3,1,128], index: 6, kind: input, shape index: {}]
  %s7 = inlined_call_operand.vmem [shape: f32[16,128], index: 7, kind: output, shape index: {}]
  %s8 = sld [smem:[#allocation0]]
  $region103: #{_omnifusion_forward.1} parent=0
    _
  %s10 = ssub.s32 1, %s8
  %s11 = scalar_select 0, %s10, %s8
  %s12 = sshll.u32 %s0, 4
  %s13 = int_to_ptr.vmem [resolvable:$true] %s12
  %15 = dma.vmem_to_smem %s13, 16, [#allocation6], [#allocation5]
  %s16 = sshll.u32 %s1, 4
  %s17 = int_to_ptr.vmem [resolvable:$true] %s16
  %19 = dma.vmem_to_smem %s17, 16, [#allocation7], [#allocation5]
  %s20 = sshll.u32 %s2, 4
  %s21 = int_to_ptr.vmem [resolvable:$true] %s20
  %23 = dma.vmem_to_smem %s21, 16, [#allocation8], [#allocation5]
  %s24 = sshll.u32 %s3, 4
  %s25 = int_to_ptr.vmem [resolvable:$true] %s24
  %27 = dma.vmem_to_smem %s25, 16, [#allocation9], [#allocation5]
  %28 = dma.done [#allocation5], 64
  %29 = sfence
  $region1: #{_omnifusion_forward.1} parent=0
    #allocation10 [shape = 'u8[16384]{0}', space=vmem, size = 0x4000, scoped, tag = 'input window, operand 4']
    #allocation11 [shape = 'u8[131072]{0}', space=vmem, size = 0x20000, scoped, tag = 'input window, operand 5']
    #allocation12 [shape = 's32[2]{0}', space=sflag, size = 0x8, scoped, tag = 'scoped memory for _omnifusion_forward.1']
    %30 = vsyncpa [#allocation12], 0
    %s31 = scalar_lea.sflag [#allocation12], 1
    %32 = vsyncpa %s31, 0
    loop: start=0, step=1, limit=8
    $region2: #{_omnifusion_forward.1} parent=1 // loop_pre_header
      _
    $region3: #{_omnifusion_forward.1} parent=1 // loop_header
      %s34 = sphi 0, %s38
      %p35 = scmp.ge.s32.totalorder %s34, 8
      %s41 = sphi 0, %s53
      %s42 = sphi 0, %s49
      %s43 = sphi 0, %s41
      %s44 = sphi 0, %s42
      %s45 = sphi 0, %s43
      %s46 = sphi 0, %s44
      %s60 = sphi 0, %s62
      %s63 = sphi 0, %s60
      %s64 = sphi 0, %s63
      %s80 = sphi 0, %s64
      %s88 = sphi 0, %s90
      %s91 = sphi 0, %s88
      %s92 = sphi 0, %s91
      %s108 = sphi 0, %s92
      %s116 = sphi 0, %s118
      %s119 = sphi 0, %s116
      %s120 = sphi 0, %s119
      %s136 = sphi 0, %s120
      %s142 = sphi 0, %s144
      %s145 = sphi 0, %s142
      %s146 = sphi 0, %s145
      %s162 = sphi 0, %s146
    $region4: #{_omnifusion_forward.1} parent=1 // loop_header_branch
      %37 = sbr.rel (%p35) target = $region8
    $region5: #{_omnifusion_forward.1} parent=1 // loop_body
      %s39 = ssub.s32 %s34, 1
      %s40 = ssub.s32 %s34, 2
      %s47 = sadd.s32 1, %s42
      %p48 = scmp.ge.s32.totalorder %s47, 6
      %s49 = scalar_select %p48, 0, %s47
      %s50 = sadd.s32 1, %s41
      %s51 = scalar_select %p48, %s50, %s41
      %p52 = scmp.ge.s32.totalorder %s51, 1
      %s53 = scalar_select %p52, 0, %s51
      %s54 = sld [smem:[#allocation6 + %s42]]
      %s55 = sld [smem:[#allocation6 + %s49]]
      %s56 = ssub.s32 %s41, %s53
      %s57 = ssub.s32 %s54, %s55
      %s58 = sor.u32 %s56, %s57
      %p59 = scmp.eq.s32.totalorder %s58, 0
      %s61 = sadd.s32 %s60, 1
      %s62 = scalar_select %p59, %s60, %s61
      %p65 = pneg %p59
      %p66 = scmp.eq.s32.totalorder %s34, 5
      %p67 = por %p65, %p66
      %p68 = scmp.ne.s32.totalorder %s60, %s63
      %p69 = scmp.eq.s32.totalorder %s34, 0
      %p70 = por %p68, %p69
      %p71 = scmp.ne.s32.totalorder %s60, %s63
      %p72 = scmp.eq.s32.totalorder %s39, 5
      %p73 = por %p71, %p72
      %p74 = scmp.ne.s32.totalorder %s63, %s64
      %p75 = scmp.eq.s32.totalorder %s39, 0
      %p76 = por %p74, %p75
      %p77 = scmp.ne.s32.totalorder %s63, %s64
      %p78 = scmp.eq.s32.totalorder %s40, 5
      %p79 = por %p77, %p78
      %p81 = scmp.ne.s32.totalorder %s64, %s80
      %p82 = scmp.eq.s32.totalorder %s40, 0
      %p83 = por %p81, %p82
      %s84 = sld [smem:[#allocation6 + %s42]]
      %s85 = sld [smem:[#allocation6 + %s49]]
      %s86 = ssub.s32 %s84, %s85
      %p87 = scmp.eq.s32.totalorder %s86, 0
      %s89 = sadd.s32 %s88, 1
      %s90 = scalar_select %p87, %s88, %s89
      %p93 = pneg %p87
      %p94 = scmp.eq.s32.totalorder %s34, 5
      %p95 = por %p93, %p94
      %p96 = scmp.ne.s32.totalorder %s88, %s91
      %p97 = scmp.eq.s32.totalorder %s34, 0
      %p98 = por %p96, %p97
      %p99 = scmp.ne.s32.totalorder %s88, %s91
      %p100 = scmp.eq.s32.totalorder %s39, 5
      %p101 = por %p99, %p100
      %p102 = scmp.ne.s32.totalorder %s91, %s92
      %p103 = scmp.eq.s32.totalorder %s39, 0
      %p104 = por %p102, %p103
      %p105 = scmp.ne.s32.totalorder %s91, %s92
      %p106 = scmp.eq.s32.totalorder %s40, 5
      %p107 = por %p105, %p106
      %p109 = scmp.ne.s32.totalorder %s92, %s108
      %p110 = scmp.eq.s32.totalorder %s40, 0
      %p111 = por %p109, %p110
      %s112 = sld [smem:[#allocation7 + %s42]]
      %s113 = sld [smem:[#allocation7 + %s49]]
      %s114 = ssub.s32 %s112, %s113
      %p115 = scmp.eq.s32.totalorder %s114, 0
      %s117 = sadd.s32 %s116, 1
      %s118 = scalar_select %p115, %s116, %s117
      %p121 = pneg %p115
      %p122 = scmp.eq.s32.totalorder %s34, 5
      %p123 = por %p121, %p122
      %p124 = scmp.ne.s32.totalorder %s116, %s119
      %p125 = scmp.eq.s32.totalorder %s34, 0
      %p126 = por %p124, %p125
      %p127 = scmp.ne.s32.totalorder %s116, %s119
      %p128 = scmp.eq.s32.totalorder %s39, 5
      %p129 = por %p127, %p128
      %p130 = scmp.ne.s32.totalorder %s119, %s120
      %p131 = scmp.eq.s32.totalorder %s39, 0
      %p132 = por %p130, %p131
      %p133 = scmp.ne.s32.totalorder %s119, %s120
      %p134 = scmp.eq.s32.totalorder %s40, 5
      %p135 = por %p133, %p134
      %p137 = scmp.ne.s32.totalorder %s120, %s136
      %p138 = scmp.eq.s32.totalorder %s40, 0
      %p139 = por %p137, %p138
      %s140 = ssub.s32 %s41, %s53
      %p141 = scmp.eq.s32.totalorder %s140, 0
      %s143 = sadd.s32 %s142, 1
      %s144 = scalar_select %p141, %s142, %s143
      %p147 = pneg %p141
      %p148 = scmp.eq.s32.totalorder %s34, 5
      %p149 = por %p147, %p148
      %p150 = scmp.ne.s32.totalorder %s142, %s145
      %p151 = scmp.eq.s32.totalorder %s34, 0
      %p152 = por %p150, %p151
      %p153 = scmp.ne.s32.totalorder %s142, %s145
      %p154 = scmp.eq.s32.totalorder %s39, 5
      %p155 = por %p153, %p154
      %p156 = scmp.ne.s32.totalorder %s145, %s146
      %p157 = scmp.eq.s32.totalorder %s39, 0
      %p158 = por %p156, %p157
      %p159 = scmp.ne.s32.totalorder %s145, %s146
      %p160 = scmp.eq.s32.totalorder %s40, 5
      %p161 = por %p159, %p160
      %p163 = scmp.ne.s32.totalorder %s146, %s162
      %p164 = scmp.eq.s32.totalorder %s40, 0
      %p165 = por %p163, %p164
      %p166 = scmp.le.s32.totalorder 1, %s34
      %p167 = scmp.lt.s32.totalorder %s34, 7
      %p168 = pnand %p166, %p167
      %p169 = pneg %p168
      // Predicated region
      $region9: #{_omnifusion_forward.1} parent=5 // pred_check
        _
      $region10: #{_omnifusion_forward.1} parent=5 // pred_check_branch
        %171 = sbr.rel (%p168) target = $region12
      $region11: #{_omnifusion_forward.1} parent=5 // pred_region
        %s172 = ssub.s32 %s34, 1
      $region12: #{_omnifusion_forward.1} parent=5 // pred_fallthru
        _
      %p173 = scmp.lt.s32.totalorder %s34, 6
      // Predicated region
      $region13: #{_omnifusion_forward.1} parent=5 // pred_check
        %p174 = pneg %p173
      $region14: #{_omnifusion_forward.1} parent=5 // pred_check_branch
        %176 = sbr.rel (%p174) target = $region16
      $region15: #{_omnifusion_forward.1} parent=5 // pred_region
        // Predicated region
        $region17: #{_omnifusion_forward.1} parent=15 // pred_check
          %p177 = pneg %p70
        $region18: #{_omnifusion_forward.1} parent=15 // pred_check_branch
          %179 = sbr.rel (%p177) target = $region20
        $region19: #{_omnifusion_forward.1} parent=15 // pred_region
          %s180 = sand.u32 %s60, 1
          %s181 = sand.u32 %s60, 1
          %s182 = smul.addr %s181, 16
          %s183 = scalar_lea.vmem [#allocation10], %s182
          %s184 = sld [smem:[#allocation6 + %s42]]
          %s185 = smul.u32 2, %s41
          %s186 = smul.u32 2, %s184
          %s187 = smul.addr %s185, 12
          %s188 = sadd.s32 %s186, %s187
          %s189 = smul.addr %s188, 4
          %s190 = scalar_lea.vmem %s4, %s189
          // Predicated region
          $region21: #{_omnifusion_forward.1} parent=19 // pred_check
            _
          $region22: #{_omnifusion_forward.1} parent=19 // pred_check_branch
            %192 = sbr.rel (0) target = $region24
          $region23: #{_omnifusion_forward.1} parent=19 // pred_region
            // Predicated region
            $region25: #{_omnifusion_forward.1} parent=23 // pred_check
              _
            $region26: #{_omnifusion_forward.1} parent=23 // pred_check_branch
              %194 = sbr.rel (0) target = $region28
            $region27: #{_omnifusion_forward.1} parent=23 // pred_region
              // Predicated region
              $region40: #{_omnifusion_forward.1} parent=27 // pred_check
                _
              $region41: #{_omnifusion_forward.1} parent=27 // pred_check_branch
                %211 = sbr.rel (0) target = $region43
              $region42: #{_omnifusion_forward.1} parent=27 // pred_region
                loop: start=0, step=1, limit=1
                $region44: #{_omnifusion_forward.1} parent=42 // loop_pre_header
                  _
                $region45: #{_omnifusion_forward.1} parent=42 // loop_header
                  %s213 = sphi 0, %s217
                  %p214 = scmp.ge.s32.totalorder %s213, 1
                  %s218 = sphi %s190, %s190
                  %s219 = sphi %s183, %s183
                $region46: #{_omnifusion_forward.1} parent=42 // loop_header_branch
                  %216 = sbr.rel (%p214) target = $region50
                $region47: #{_omnifusion_forward.1} parent=42 // loop_body
                  %v220 = vld [vmem:[%s218] sm:$0xff]
                  %221 = vst [vmem:[%s219] sm:$0xff] %v220
                  %v222 = vld [vmem:[%s218 + $0x30] sm:$0xff]
                  %223 = vst [vmem:[%s219 + $0x8] sm:$0xff] %v222
                $region48: #{_omnifusion_forward.1} parent=42 // loop_footer
                  %s217 = sadd.s32 1, %s213
                $region49: #{_omnifusion_forward.1} parent=42 // loop_footer_branch
                  %212 = sbr.rel target = $region45
                $region50: #{_omnifusion_forward.1} parent=42 // loop_exit
                  _
              $region43: #{_omnifusion_forward.1} parent=27 // pred_fallthru
                _
              // Predicated region
              $region51: #{_omnifusion_forward.1} parent=27 // pred_check
                _
              $region52: #{_omnifusion_forward.1} parent=27 // pred_check_branch
                %225 = sbr.rel target = $region54
              $region53: #{_omnifusion_forward.1} parent=27 // pred_region
                _
              $region54: #{_omnifusion_forward.1} parent=27 // pred_fallthru
                _
            $region28: #{_omnifusion_forward.1} parent=23 // pred_fallthru
              _
            // Predicated region
            $region29: #{_omnifusion_forward.1} parent=23 // pred_check
              _
            $region30: #{_omnifusion_forward.1} parent=23 // pred_check_branch
              %196 = sbr.rel target = $region32
            $region31: #{_omnifusion_forward.1} parent=23 // pred_region
              loop: start=0, step=1, limit=1
              $region33: #{_omnifusion_forward.1} parent=31 // loop_pre_header
                _
              $region34: #{_omnifusion_forward.1} parent=31 // loop_header
                %s199 = sphi 0, %s203
                %p200 = scmp.ge.s32.totalorder %s199, 1
                %s204 = sphi %s190, %s190
                %s205 = sphi %s183, %s183
              $region35: #{_omnifusion_forward.1} parent=31 // loop_header_branch
                %202 = sbr.rel (%p200) target = $region39
              $region36: #{_omnifusion_forward.1} parent=31 // loop_body
                %v206 = vld [vmem:[%s204] sm:$0xff]
                %207 = vst [vmem:[%s205] sm:$0xff] %v206
                %v208 = vld [vmem:[%s204 + $0x30] sm:$0xff]
                %209 = vst [vmem:[%s205 + $0x8] sm:$0xff] %v208
              $region37: #{_omnifusion_forward.1} parent=31 // loop_footer
                %s203 = sadd.s32 1, %s199
              $region38: #{_omnifusion_forward.1} parent=31 // loop_footer_branch
                %198 = sbr.rel target = $region34
              $region39: #{_omnifusion_forward.1} parent=31 // loop_exit
                _
            $region32: #{_omnifusion_forward.1} parent=23 // pred_fallthru
              _
          $region24: #{_omnifusion_forward.1} parent=19 // pred_fallthru
            _
          %226 = vnop
        $region20: #{_omnifusion_forward.1} parent=15 // pred_fallthru
          _
        // Predicated region
        $region55: #{_omnifusion_forward.1} parent=15 // pred_check
          %p227 = pneg %p98
        $region56: #{_omnifusion_forward.1} parent=15 // pred_check_branch
          %229 = sbr.rel (%p227) target = $region58
        $region57: #{_omnifusion_forward.1} parent=15 // pred_region
          %s230 = sand.u32 %s88, 1
          %s231 = scalar_lea.sflag [#allocation12], %s230
          %s232 = sand.u32 %s88, 1
          %s233 = smul.addr %s232, 128
          %s234 = scalar_lea.vmem [#allocation11], %s233
          %s235 = sld [smem:[#allocation6 + %s42]]
          %s236 = smul.u32 32, %s235
          %s238 = ssub.s32 2048, 2048
          %239 = vsyncadd %s231, %s238
          %s240 = smul.addr %s236, 64
          %s241 = scalar_lea.hbm %s5, %s240
          %s242 = sshll.u32 %s234, 4
          %s243 = int_to_ptr.vmem [resolvable:$true] %s242
          %248 = dma.hbm_to_vmem [thread:$0]  %s241, 2048, %s243, %s231, 64, 64, 4
        $region58: #{_omnifusion_forward.1} parent=15 // pred_fallthru
          _
        // Predicated region
        $region59: #{_omnifusion_forward.1} parent=15 // pred_check
          %p249 = pneg %p126
        $region60: #{_omnifusion_forward.1} parent=15 // pred_check_branch
          %251 = sbr.rel (%p249) target = $region62
        $region61: #{_omnifusion_forward.1} parent=15 // pred_region
          %s252 = sld [smem:[#allocation7 + %s42]]
          %p253 = scmp.lt.s32.totalorder %s252, 2
          %s254 = scalar_select %p253, %s252, 2
          %s255 = scalar_lea.vmem %s6, %s254
          %s256 = sld [smem:[#allocation7 + %s42]]
        $region62: #{_omnifusion_forward.1} parent=15 // pred_fallthru
          _
      $region16: #{_omnifusion_forward.1} parent=5 // pred_fallthru
        _
      %p257 = scmp.le.s32.totalorder 1, %s34
      %p258 = scmp.lt.s32.totalorder %s34, 7
      %p259 = pnand %p257, %p258
      %p260 = pneg %p259
      // Predicated region
      $region63: #{_omnifusion_forward.1} parent=5 // pred_check
        _
      $region64: #{_omnifusion_forward.1} parent=5 // pred_check_branch
        %262 = sbr.rel (%p259) target = $region66
      $region65: #{_omnifusion_forward.1} parent=5 // pred_region
        %s263 = ssub.s32 %s34, 1
        %s264 = sand.u32 %s63, 1
        %s265 = sand.u32 %s63, 1
        %s266 = smul.addr %s265, 16
        %s267 = scalar_lea.vmem [#allocation10], %s266
        // Predicated region
        $region67: #{_omnifusion_forward.1} parent=65 // pred_check
          %p268 = pneg %p76
        $region68: #{_omnifusion_forward.1} parent=65 // pred_check_branch
          %270 = sbr.rel (%p268) target = $region70
        $region69: #{_omnifusion_forward.1} parent=65 // pred_region
          _
        $region70: #{_omnifusion_forward.1} parent=65 // pred_fallthru
          _
        %s271 = sand.u32 %s91, 1
        %s272 = scalar_lea.sflag [#allocation12], %s271
        %s273 = sand.u32 %s91, 1
        %s274 = smul.addr %s273, 128
        %s275 = scalar_lea.vmem [#allocation11], %s274
        // Predicated region
        $region71: #{_omnifusion_forward.1} parent=65 // pred_check
          %p276 = pneg %p104
        $region72: #{_omnifusion_forward.1} parent=65 // pred_check_branch
          %278 = sbr.rel (%p276) target = $region74
        $region73: #{_omnifusion_forward.1} parent=65 // pred_region
          %279 = dma.done %s272, 2048
        $region74: #{_omnifusion_forward.1} parent=65 // pred_fallthru
          _
        %s280 = sand.u32 %s63, 1
        %s281 = sand.u32 %s63, 1
        %s282 = smul.addr %s281, 16
        %s283 = scalar_lea.vmem [#allocation10], %s282
        %p284 = pneg %p76
        %p285 = pneg %p73
        %s286 = sand.u32 %s91, 1
        %s287 = scalar_lea.sflag [#allocation12], %s286
        %s288 = sand.u32 %s91, 1
        %s289 = smul.addr %s288, 128
        %s290 = scalar_lea.vmem [#allocation11], %s289
        %p291 = pneg %p104
        %p292 = pneg %p101
        %s293 = sld [smem:[#allocation7 + %s44]]
        %p294 = scmp.lt.s32.totalorder %s293, 2
        %s295 = scalar_select %p294, %s293, 2
        %s296 = scalar_lea.vmem %s6, %s295
        %p297 = pneg %p132
        %p298 = pneg %p129
        %p299 = pneg %p158
        %p300 = pneg %p155
        %s301 = smul.u32 2, %s43
        %p302 = scmp.lt.s32.totalorder %s301, 1
        %s303 = scalar_select %p302, %s301, 1
        %s304 = smul.addr %s303, 8
        %s305 = scalar_lea.vmem %s7, %s304
        %s306 = sld [smem:[#allocation6 + %s44]]
        %s307 = smul.u32 2, %s43
        %s308 = smul.u32 2, %s306
        %s309 = sld [smem:[#allocation6 + %s44]]
        %s310 = smul.u32 32, %s309
        %s311 = sld [smem:[#allocation7 + %s44]]
        %p312 = scmp.lt.s32.totalorder %s311, 2
        %s313 = scalar_select %p312, %s311, 2
        %s314 = scalar_lea.vmem %s6, %s313
        %s315 = sld [smem:[#allocation7 + %s44]]
        %s316 = smul.u32 2, %s43
        %p317 = scmp.lt.s32.totalorder %s316, 1
        %s318 = scalar_select %p317, %s316, 1
        %s319 = smul.addr %s318, 8
        %s320 = scalar_lea.vmem %s7, %s319
        %s321 = smul.u32 2, %s43
        %p323 = scmp.eq.s32.totalorder %s44, 0
        // Predicated region
        $region75: #{_omnifusion_forward.1} parent=65 // pred_check
          %p324 = pneg %p323
        $region76: #{_omnifusion_forward.1} parent=65 // pred_check_branch
          %326 = sbr.rel (%p324) target = $region78
        $region77: #{_omnifusion_forward.1} parent=65 // pred_region
          %327 = vst [vmem:[%s320] sm:$0xff] 0.0
          %328 = vst [vmem:[%s320 + $0x8] sm:$0xff] 0.0
          %vm329 = vcmask 7168
          %330 = vst.msk [vmem:[#allocation4] sm:$0xff] %vm329, 0.0
          %331 = vst.msk [vmem:[#allocation4 + $0x8] sm:$0xff] %vm329, 0.0
          %332 = vst.msk [vmem:[#allocation3] sm:$0xff] %vm329, -inf
          %333 = vst.msk [vmem:[#allocation3 + $0x8] sm:$0xff] %vm329, -inf
        $region78: #{_omnifusion_forward.1} parent=65 // pred_fallthru
          _
        %s334 = sld [smem:[#allocation8 + %s44]]
        %p335 = scmp.eq.s32.totalorder %s334, 1
        // Predicated region
        $region79: #{_omnifusion_forward.1} parent=65 // pred_check
          %p336 = pneg %p335
        $region80: #{_omnifusion_forward.1} parent=65 // pred_check_branch
          %338 = sbr.rel (%p336) target = $region82
        $region81: #{_omnifusion_forward.1} parent=65 // pred_region
          %339 = vst [vmem:[#allocation2] sm:$0xff] 0.0
          %340 = vst [vmem:[#allocation2 + $0x8] sm:$0xff] 0.0
        $region82: #{_omnifusion_forward.1} parent=65 // pred_fallthru
          _
        %v341 = vld [vmem:[#allocation2] sm:$0xff]
        %v342 = vld [vmem:[#allocation2 + $0x8] sm:$0xff]
        %v343 = vld [vmem:[%s267] sm:$0xff]
        %v344 = vld [vmem:[%s267 + $0x8] sm:$0xff]
        %v345 = vld [vmem:[%s275] sm:$0xf]
        %v346 = vld [vmem:[%s275 + $0x4] sm:$0xf]
        %v347 = vld [vmem:[%s275 + $0x8] sm:$0xf]
        %v348 = vld [vmem:[%s275 + $0xc] sm:$0xf]
        %v349 = vld [vmem:[%s275 + $0x10] sm:$0xf]
        %v350 = vld [vmem:[%s275 + $0x14] sm:$0xf]
        %v351 = vld [vmem:[%s275 + $0x18] sm:$0xf]
        %v352 = vld [vmem:[%s275 + $0x1c] sm:$0xf]
        %v353 = vld [vmem:[%s275 + $0x20] sm:$0xf]
        %v354 = vld [vmem:[%s275 + $0x24] sm:$0xf]
        %v355 = vld [vmem:[%s275 + $0x28] sm:$0xf]
        %v356 = vld [vmem:[%s275 + $0x2c] sm:$0xf]
        %v357 = vld [vmem:[%s275 + $0x30] sm:$0xf]
        %v358 = vld [vmem:[%s275 + $0x34] sm:$0xf]
        %v359 = vld [vmem:[%s275 + $0x38] sm:$0xf]
        %v360 = vld [vmem:[%s275 + $0x3c] sm:$0xf]
        %v361 = vld [vmem:[%s275 + $0x40] sm:$0xf]
        %v362 = vld [vmem:[%s275 + $0x44] sm:$0xf]
        %v363 = vld [vmem:[%s275 + $0x48] sm:$0xf]
        %v364 = vld [vmem:[%s275 + $0x4c] sm:$0xf]
        %v365 = vld [vmem:[%s275 + $0x50] sm:$0xf]
        %v366 = vld [vmem:[%s275 + $0x54] sm:$0xf]
        %v367 = vld [vmem:[%s275 + $0x58] sm:$0xf]
        %v368 = vld [vmem:[%s275 + $0x5c] sm:$0xf]
        %v369 = vld [vmem:[%s275 + $0x60] sm:$0xf]
        %v370 = vld [vmem:[%s275 + $0x64] sm:$0xf]
        %v371 = vld [vmem:[%s275 + $0x68] sm:$0xf]
        %v372 = vld [vmem:[%s275 + $0x6c] sm:$0xf]
        %v373 = vld [vmem:[%s275 + $0x70] sm:$0xf]
        %v374 = vld [vmem:[%s275 + $0x74] sm:$0xf]
        %v375 = vld [vmem:[%s275 + $0x78] sm:$0xf]
        %v376 = vld [vmem:[%s275 + $0x7c] sm:$0xf]
        %v379 = vunpack.c.l.b16 %v343
        %v380 = vunpack.c.h.b16 %v343
        %v381 = vunpack.c.l.b16 %v344
        %v382 = vunpack.c.h.b16 %v344
        %v383 = vpack.c.b16 %v381, %v379
        %v384 = vpack.c.b16 %v382, %v380
        %v419 = vunpack.c.l.b16 %v345
        %v420 = vunpack.c.l.b16 %v346
        %v421 = vunpack.c.l.b16 %v347
        %v422 = vunpack.c.l.b16 %v348
        %v423 = vunpack.c.l.b16 %v349
        %v424 = vunpack.c.l.b16 %v350
        %v425 = vunpack.c.l.b16 %v351
        %v426 = vunpack.c.l.b16 %v352
        %v427 = vunpack.c.l.b16 %v353
        %v428 = vunpack.c.l.b16 %v354
        %v429 = vunpack.c.l.b16 %v355
        %v430 = vunpack.c.l.b16 %v356
        %v431 = vunpack.c.l.b16 %v357
        %v432 = vunpack.c.l.b16 %v358
        %v433 = vunpack.c.l.b16 %v359
        %v434 = vunpack.c.l.b16 %v360
        %v435 = vunpack.c.l.b16 %v361
        %v436 = vunpack.c.l.b16 %v362
        %v437 = vunpack.c.l.b16 %v363
        %v438 = vunpack.c.l.b16 %v364
        %v439 = vunpack.c.l.b16 %v365
        %v440 = vunpack.c.l.b16 %v366
        %v441 = vunpack.c.l.b16 %v367
        %v442 = vunpack.c.l.b16 %v368
        %v443 = vunpack.c.l.b16 %v369
        %v444 = vunpack.c.l.b16 %v370
        %v445 = vunpack.c.l.b16 %v371
        %v446 = vunpack.c.l.b16 %v372
        %v447 = vunpack.c.l.b16 %v373
        %v448 = vunpack.c.l.b16 %v374
        %v449 = vunpack.c.l.b16 %v375
        %v450 = vunpack.c.l.b16 %v376
        %v451 = vpack.c.b16 %v420, %v419
        %v452 = vpack.c.b16 %v422, %v421
        %v453 = vpack.c.b16 %v424, %v423
        %v454 = vpack.c.b16 %v426, %v425
        %v455 = vpack.c.b16 %v428, %v427
        %v456 = vpack.c.b16 %v430, %v429
        %v457 = vpack.c.b16 %v432, %v431
        %v458 = vpack.c.b16 %v434, %v433
        %v459 = vpack.c.b16 %v436, %v435
        %v460 = vpack.c.b16 %v438, %v437
        %v461 = vpack.c.b16 %v440, %v439
        %v462 = vpack.c.b16 %v442, %v441
        %v463 = vpack.c.b16 %v444, %v443
        %v464 = vpack.c.b16 %v446, %v445
        %v465 = vpack.c.b16 %v448, %v447
        %v466 = vpack.c.b16 %v450, %v449
        %483 = vmatprep.subr.bf16.mxu0 0
        %484 = vmatpush1.bf16.msra.mxu0 %v451
        %485 = vmatprep.subr.bf16.mxu0 0
        %486 = vmatpush1.bf16.msra.mxu0 %v452
        %487 = vmatprep.subr.bf16.mxu0 0
        %488 = vmatpush1.bf16.msra.mxu0 %v453
        %489 = vmatprep.subr.bf16.mxu0 0
        %490 = vmatpush1.bf16.msra.mxu0 %v454
        %491 = vmatprep.subr.bf16.mxu0 0
        %492 = vmatpush1.bf16.msra.mxu0 %v455
        %493 = vmatprep.subr.bf16.mxu0 0
        %494 = vmatpush1.bf16.msra.mxu0 %v456
        %495 = vmatprep.subr.bf16.mxu0 0
        %496 = vmatpush1.bf16.msra.mxu0 %v457
        %497 = vmatprep.subr.bf16.mxu0 0
        %498 = vmatpush1.bf16.msra.mxu0 %v458
        %499 = vmatprep.subr.bf16.mxu0 0
        %500 = vmatpush1.bf16.msra.mxu0 %v459
        %501 = vmatprep.subr.bf16.mxu0 0
        %502 = vmatpush1.bf16.msra.mxu0 %v460
        %503 = vmatprep.subr.bf16.mxu0 0
        %504 = vmatpush1.bf16.msra.mxu0 %v461
        %505 = vmatprep.subr.bf16.mxu0 0
        %506 = vmatpush1.bf16.msra.mxu0 %v462
        %507 = vmatprep.subr.bf16.mxu0 0
        %508 = vmatpush1.bf16.msra.mxu0 %v463
        %509 = vmatprep.subr.bf16.mxu0 0
        %510 = vmatpush1.bf16.msra.mxu0 %v464
        %511 = vmatprep.subr.bf16.mxu0 0
        %512 = vmatpush1.bf16.msra.mxu0 %v465
        %513 = vmatprep.subr.bf16.mxu0 0
        %514 = vmatpush1.bf16.msra.mxu0 %v466
        %515 = vmatprep.mubr.bf16.mxu0 %v384
        %516 = vmatmul.mubr.bf16.gmra.mrb[0].mxu0 %v383
        %v517 = vpop.f32.mrb[0].mxu0
        %v518 = vadd.f32 0.0, %v517
        %v519 = vpop.f32.mrb[0].mxu0
        %v520 = vpop.f32.mrb[0].mxu0
        %v521 = vadd.f32 0.0, %v520
        %v522 = vpop.f32.mrb[0].mxu0
        %523 = vdwg.mxu0
        %v524 = vadd.f32 %v341, %v518
        %v525 = vadd.f32 %v342, %v521
        %526 = vst [vmem:[#allocation2] sm:$0xff] %v524
        %527 = vst [vmem:[#allocation2 + $0x8] sm:$0xff] %v525
        %s528 = sld [smem:[#allocation9 + %s44]]
        %p529 = scmp.eq.s32.totalorder %s528, 1
        // Predicated region
        $region83: #{_omnifusion_forward.1} parent=65 // pred_check
          %p530 = pneg %p529
        $region84: #{_omnifusion_forward.1} parent=65 // pred_check_branch
          %532 = sbr.rel (%p530) target = $region86
        $region85: #{_omnifusion_forward.1} parent=65 // pred_region
          %v533 = vld [vmem:[#allocation2] sm:$0xff]
          %v534 = vld [vmem:[#allocation2 + $0x8] sm:$0xff]
          %v535 = vld [vmem:[%s314] sm:$0x1]
          %v537 = vlaneseq
          %v538 = vshrl.u32 %v537, 7
          %v539 = vsub.s32 0, %v538
          %v540 = vrot.slane %v535, %v539
          %v542 = vadd.f32 %v533, %v540
          %v543 = vadd.f32 %v534, %v540
          %544 = vadd.xlane.f32.xlu0 %v542
          %v545 = vpop.xlane.xlu0 %544
          %546 = vadd.xlane.f32.xlu0 %v543
          %v547 = vpop.xlane.xlu0 %546
          %v548 = vmul.f32 %v545, 0.03125
          %v549 = vmul.f32 %v547, 0.03125
          %v550 = vld [vmem:[#allocation3] sm:$0xff]
          %v551 = vld [vmem:[#allocation3 + $0x8] sm:$0xff]
          %v552 = vmax.f32 %v550, %v548
          %v553 = vmax.f32 %v551, %v549
          %v554 = vsub.f32 %v550, %v552
          %v555 = vsub.f32 %v551, %v553
          %v556 = vmul.f32 %v554, 1.442695
          %v557 = vpow.pop %v556
          %v558 = vmul.f32 %v555, 1.442695
          %v559 = vpow.pop %v558
          %v560 = vsub.f32 %v548, %v552
          %v561 = vsub.f32 %v549, %v553
          %v562 = vmul.f32 %v560, 1.442695
          %v563 = vpow.pop %v562
          %v564 = vmul.f32 %v561, 1.442695
          %v565 = vpow.pop %v564
          %v566 = vld [vmem:[#allocation4] sm:$0xff]
          %v567 = vld [vmem:[#allocation4 + $0x8] sm:$0xff]
          %v568 = vmul.f32 %v557, %v566
          %v569 = vmul.f32 %v559, %v567
          %v570 = vadd.f32 %v568, %v563
          %v571 = vadd.f32 %v569, %v565
          %vm572 = vcmask 7168
          %573 = vst.msk [vmem:[#allocation4] sm:$0xff] %vm572, %v570
          %574 = vst.msk [vmem:[#allocation4 + $0x8] sm:$0xff] %vm572, %v571
          %v575 = vld [vmem:[%s320] sm:$0xff]
          %v576 = vld [vmem:[%s320 + $0x8] sm:$0xff]
          %578 = vset.pattern.permute.xlu0 0
          %579 = vperm.xlu0 %578, %v557
          %v580 = vpop.permute.xlu0 %579
          %583 = vset.pattern.permute.xlu0 0
          %584 = vperm.xlu0 %583, %v559
          %v585 = vpop.permute.xlu0 %584
          %v587 = vmul.f32 %v580, %v575
          %v588 = vmul.f32 %v585, %v576
          %590 = vset.pattern.permute.xlu0 0
          %591 = vperm.xlu0 %590, %v563
          %v592 = vpop.permute.xlu0 %591
          %595 = vset.pattern.permute.xlu0 0
          %596 = vperm.xlu0 %595, %v565
          %v597 = vpop.permute.xlu0 %596
          %v599 = vmul.f32 %v592, %v542
          %v600 = vmul.f32 %v597, %v543
          %v601 = vadd.f32 %v587, %v599
          %v602 = vadd.f32 %v588, %v600
          %603 = vst [vmem:[%s320] sm:$0xff] %v601
          %604 = vst [vmem:[%s320 + $0x8] sm:$0xff] %v602
          %605 = vst.msk [vmem:[#allocation3] sm:$0xff] %vm572, %v552
          %606 = vst.msk [vmem:[#allocation3 + $0x8] sm:$0xff] %vm572, %v553
        $region86: #{_omnifusion_forward.1} parent=65 // pred_fallthru
          _
        %p607 = scmp.eq.s32.totalorder %s44, 5
        // Predicated region
        $region87: #{_omnifusion_forward.1} parent=65 // pred_check
          %p608 = pneg %p607
        $region88: #{_omnifusion_forward.1} parent=65 // pred_check_branch
          %610 = sbr.rel (%p608) target = $region90
        $region89: #{_omnifusion_forward.1} parent=65 // pred_region
          %v611 = vld [vmem:[%s320] sm:$0xff]
          %v612 = vld [vmem:[%s320 + $0x8] sm:$0xff]
          %v613 = vld [vmem:[#allocation4] sm:$0xff]
          %v614 = vld [vmem:[#allocation4 + $0x8] sm:$0xff]
          %616 = vset.pattern.permute.xlu0 0
          %617 = vperm.xlu0 %616, %v613
          %v618 = vpop.permute.xlu0 %617
          %621 = vset.pattern.permute.xlu0 0
          %622 = vperm.xlu0 %621, %v614
          %v623 = vpop.permute.xlu0 %622
          %v625 = vrcp.pop %v618
          %v626 = vmul.f32 %v611, %v625
          %v627 = vrcp.pop %v623
          %v628 = vmul.f32 %v612, %v627
          %629 = vst [vmem:[%s320] sm:$0xff] %v626
          %630 = vst [vmem:[%s320 + $0x8] sm:$0xff] %v628
        $region90: #{_omnifusion_forward.1} parent=65 // pred_fallthru
          _
        %s631 = smul.u32 2, %s43
        %p632 = scmp.lt.s32.totalorder %s631, 1
        %s633 = scalar_select %p632, %s631, 1
        %s634 = smul.addr %s633, 8
        %s635 = scalar_lea.vmem %s7, %s634
        // Predicated region
        $region91: #{_omnifusion_forward.1} parent=65 // pred_check
          %p636 = pneg %p155
        $region92: #{_omnifusion_forward.1} parent=65 // pred_check_branch
          %638 = sbr.rel (%p636) target = $region94
        $region93: #{_omnifusion_forward.1} parent=65 // pred_region
          %s639 = smul.u32 2, %s43
        $region94: #{_omnifusion_forward.1} parent=65 // pred_fallthru
          _
        // Predicated region
        $region95: #{_omnifusion_forward.1} parent=65 // pred_check
          %p640 = pneg %p155
        $region96: #{_omnifusion_forward.1} parent=65 // pred_check_branch
          %642 = sbr.rel (%p640) target = $region98
        $region97: #{_omnifusion_forward.1} parent=65 // pred_region
          %s643 = smul.u32 2, %s43
          %p644 = scmp.lt.s32.totalorder %s643, 1
          %s645 = scalar_select %p644, %s643, 1
          %s646 = smul.addr %s645, 8
          %s647 = scalar_lea.vmem %s7, %s646
        $region98: #{_omnifusion_forward.1} parent=65 // pred_fallthru
          _
      $region66: #{_omnifusion_forward.1} parent=5 // pred_fallthru
        _
      %p648 = scmp.le.s32.totalorder 2, %s34
      // Predicated region
      $region99: #{_omnifusion_forward.1} parent=5 // pred_check
        %p649 = pneg %p648
      $region100: #{_omnifusion_forward.1} parent=5 // pred_check_branch
        %651 = sbr.rel (%p649) target = $region102
      $region101: #{_omnifusion_forward.1} parent=5 // pred_region
        %s652 = ssub.s32 %s34, 2
      $region102: #{_omnifusion_forward.1} parent=5 // pred_fallthru
        _
    $region6: #{_omnifusion_forward.1} parent=1 // loop_footer
      %s38 = sadd.s32 1, %s34
    $region7: #{_omnifusion_forward.1} parent=1 // loop_footer_branch
      %33 = sbr.rel target = $region3
    $region8: #{_omnifusion_forward.1} parent=1 // loop_exit
      _
    %653 = vsyncpa [#allocation12], 1
    %s654 = scalar_lea.sflag [#allocation12], 1
    %655 = vsyncpa %s654, 1

</llo_original>
